<compile_context>
chip_gen: v5e
topology: v5e:2x2
jax: 0.10.0
libtpu: 0.0.40
codegen_flags: <defaults>
</compile_context>

<pallas_src>
import functools

import jax
import jax.numpy as jnp
from jax.experimental import pallas as pl
from jax.experimental.pallas import tpu as pltpu

_LANE = 128      # TPU lane width: weight/bias padded to this for a lane-dense MXU op.
_SUBLANE = 8     # row-tile granularity


def _round_up(x: int, m: int) -> int:
    return ((x + m - 1) // m) * m


def _linear_kernel(x_ref, w_ref, b_ref, o_ref):
    # Lane-dense MXU matmul [tn, K] @ [K, 128] with f32 accumulation, bias add
    # on the VPU, then store only the useful emb_dim lanes.  The narrow store
    # is free here (the vst slot has huge slack) and it keeps HBM writes to
    # exactly the useful bytes.
    emb_dim = o_ref.shape[-1]
    acc = jnp.dot(x_ref[...], w_ref[...], preferred_element_type=jnp.float32)
    o_ref[...] = (acc + b_ref[...])[:, :emb_dim].astype(o_ref.dtype)


@functools.partial(
    jax.jit,
    static_argnames=("tile_n", "force_pallas", "small_batch_threshold"),
)
def simple_forward(hits, weight, bias, *, tile_n: int = 4096,
                   force_pallas: bool = False,
                   small_batch_threshold: int = 2048):
    """Forward pass of `Simple`.

    hits:   [N, input_dim]
    weight: [emb_dim, input_dim]   (torch nn.Linear layout)
    bias:   [emb_dim]
    returns [N, emb_dim]
    """
    N, input_dim = hits.shape
    emb_dim = weight.shape[0]

    # --- small-batch fast path ---------------------------------------------
    # A pallas_call (grid setup, double-buffered DMAs) has fixed microsecond
    # overhead; for small N a single fused XLA GEMV is faster or equal.
    if (not force_pallas) and N < small_batch_threshold:
        return hits @ jnp.transpose(weight) + bias[None, :]

    # --- lane-dense weight / bias for the MXU op ----------------------------
    # Padded columns / lanes are zero; they never reach HBM on the output side.
    # (In a real model this is precomputed once at init; kept here so the
    #  wrapper accepts raw torch-layout parameters.)
    emb_pad = _round_up(max(emb_dim, 1), _LANE)            # e.g. 3 -> 128
    w_t = jnp.zeros((input_dim, emb_pad), dtype=weight.dtype)
    w_t = w_t.at[:, :emb_dim].set(jnp.transpose(weight))
    b_pad = jnp.zeros((1, emb_pad), dtype=bias.dtype)
    b_pad = b_pad.at[0, :emb_dim].set(bias)

    # --- row tiling (no activation padding copy) ----------------------------
    # Largest sublane-aligned tile <= tile_n that still yields >= 2 grid steps
    # (so both v7x TensorCores get work); ragged last block handled by Pallas.
    tn = min(tile_n, _round_up(pl.cdiv(N, 2), _SUBLANE))
    tn = max(tn, _SUBLANE)
    grid = (pl.cdiv(N, tn),)

    ib = jnp.dtype(hits.dtype).itemsize
    cost = pl.CostEstimate(
        flops=2 * N * input_dim * emb_dim,
        transcendentals=0,
        bytes_accessed=(N * input_dim + N * emb_dim) * ib
        + (input_dim * emb_pad + emb_pad) * jnp.dtype(weight.dtype).itemsize,
    )

    return pl.pallas_call(
        _linear_kernel,
        out_shape=jax.ShapeDtypeStruct((N, emb_dim), hits.dtype),
        grid=grid,
        in_specs=[
            # Row tile of activations.
            pl.BlockSpec((tn, input_dim), lambda i: (i, 0)),
            # Weight: resident across all row tiles.
            pl.BlockSpec((input_dim, emb_pad), lambda i: (0, 0)),
            # Bias: resident across all row tiles.
            pl.BlockSpec((1, emb_pad), lambda i: (0, 0)),
        ],
        # Last dim equals the full array dim, so the (8,128) rule is satisfied.
        out_specs=pl.BlockSpec((tn, emb_dim), lambda i: (i, 0)),
        compiler_params=pltpu.CompilerParams(
            # Row tiles are independent -> shard across TCs on v7x megacore.
            dimension_semantics=("parallel",),
        ),
        cost_estimate=cost,
    )(hits, w_t, b_pad)


if __name__ == "__main__":
    # Module hyperparameters implied by Simple.__init__ (nb_hidden/nb_layer unused).
    input_dim = 32
    emb_dim = 3

    key = jax.random.PRNGKey(0)
    k_x, k_w, k_b, k_x2 = jax.random.split(key, 4)

    # Deterministic synthetic parameters in the same layout as nn.Linear.
    weight = jax.random.normal(k_w, (emb_dim, input_dim), dtype=jnp.float32) * 0.1
    bias = jax.random.normal(k_b, (emb_dim,), dtype=jnp.float32) * 0.1

    # 1) Small batch forced through the Pallas kernel (single-tile grid).
    hits_small = jax.random.normal(k_x, (8, input_dim), dtype=jnp.float32)
    out_small = jax.block_until_ready(
        simple_forward(hits_small, weight, bias, force_pallas=True))
    ref_small = hits_small @ jnp.transpose(weight) + bias[None, :]
    assert out_small.shape == (8, emb_dim)
    assert jnp.allclose(out_small, ref_small, atol=1e-5, rtol=1e-5)

    # 2) Multi-tile grid with a ragged last block (N not a multiple of tn).
    hits_big = jax.random.normal(k_x2, (300, input_dim), dtype=jnp.float32)
    out_big = jax.block_until_ready(
        simple_forward(hits_big, weight, bias, tile_n=128, force_pallas=True))
    ref_big = hits_big @ jnp.transpose(weight) + bias[None, :]
    assert out_big.shape == (300, emb_dim)
    assert jnp.allclose(out_big, ref_big, atol=1e-5, rtol=1e-5)

    # 3) Default path (small N -> XLA fast path), identical semantics.
    out_fp = jax.block_until_ready(simple_forward(hits_small, weight, bias))
    assert jnp.allclose(out_fp, ref_small, atol=1e-5, rtol=1e-5)

    print("KERNEL_OK")
</pallas_src>

<mosaic_0001>
module attributes {stable_mosaic.version = 11 : i64} {
  func.func @_linear_kernel(%arg0: i32, %arg1: memref<8x32xf32, #tpu.memory_space<vmem>>, %arg2: memref<32x128xf32, #tpu.memory_space<vmem>>, %arg3: memref<1x128xf32, #tpu.memory_space<vmem>>, %arg4: memref<8x3xf32, #tpu.memory_space<vmem>>) attributes {dimension_semantics = [#tpu.dimension_semantics<parallel>], iteration_bounds = array<i64: 1>, scalar_prefetch = 0 : i64, scratch_operands = 0 : i64, tpu.core_type = #tpu.core_type<tc>, window_params = [{transform_indices = @transform_0, window_bounds = array<i64: 8, 32>}, {pipeline_mode = #tpu.pipeline_mode<synchronous>, transform_indices = @transform_1, window_bounds = array<i64: 32, 128>}, {pipeline_mode = #tpu.pipeline_mode<synchronous>, transform_indices = @transform_2, window_bounds = array<i64: 1, 128>}, {transform_indices = @transform_3, window_bounds = array<i64: 8, 3>}]} {
    %c0 = arith.constant 0 : index
    %c0_0 = arith.constant 0 : index
    %0 = vector.load %arg1[%c0, %c0_0] : memref<8x32xf32, #tpu.memory_space<vmem>>, vector<8x32xf32>
    %c0_1 = arith.constant 0 : index
    %c0_2 = arith.constant 0 : index
    %1 = vector.load %arg2[%c0_1, %c0_2] : memref<32x128xf32, #tpu.memory_space<vmem>>, vector<32x128xf32>
    %cst = arith.constant dense<0.000000e+00> : vector<8x128xf32>
    %2 = tpu.matmul %0, %1, %cst {dimension_numbers = #tpu.dot_dimension_numbers<[1], [0], [0], [1], [0, 0, 1, 1], [], []>} : vector<8x32xf32>, vector<32x128xf32>, vector<8x128xf32> -> vector<8x128xf32>
    %c0_3 = arith.constant 0 : index
    %c0_4 = arith.constant 0 : index
    %3 = vector.load %arg3[%c0_3, %c0_4] : memref<1x128xf32, #tpu.memory_space<vmem>>, vector<1x128xf32>
    %4 = vector.broadcast %3 : vector<1x128xf32> to vector<8x128xf32>
    %5 = arith.addf %2, %4 : vector<8x128xf32>
    %6 = vector.extract_strided_slice %5 {offsets = [0, 0], sizes = [8, 3], strides = [1, 1]} : vector<8x128xf32> to vector<8x3xf32>
    %c0_5 = arith.constant 0 : index
    %c0_6 = arith.constant 0 : index
    %7 = vector.load %arg4[%c0_5, %c0_6] : memref<8x3xf32, #tpu.memory_space<vmem>>, vector<8x3xf32>
    tpu.vector_store %arg4[%c0_5, %c0_6], %6 {strides = array<i32>} : memref<8x3xf32, #tpu.memory_space<vmem>>, vector<8x3xf32>,
    return
  }
  func.func @transform_0(%arg0: i32) -> (i32, i32) {
    %c0_i32 = arith.constant 0 : i32
    %c0_i32_0 = arith.constant 0 : i32
    return %arg0, %c0_i32 : i32, i32
  }
  func.func @transform_1(%arg0: i32) -> (i32, i32) {
    %c0_i32 = arith.constant 0 : i32
    %c0_i32_0 = arith.constant 0 : i32
    %c0_i32_1 = arith.constant 0 : i32
    return %c0_i32, %c0_i32_0 : i32, i32
  }
  func.func @transform_2(%arg0: i32) -> (i32, i32) {
    %c0_i32 = arith.constant 0 : i32
    %c0_i32_0 = arith.constant 0 : i32
    %c0_i32_1 = arith.constant 0 : i32
    return %c0_i32, %c0_i32_0 : i32, i32
  }
  func.func @transform_3(%arg0: i32) -> (i32, i32) {
    %c0_i32 = arith.constant 0 : i32
    %c0_i32_0 = arith.constant 0 : i32
    return %arg0, %c0_i32 : i32, i32
  }
}

</mosaic_0001>

<llo_original>
// kernel: simple_forward.1
$region0: #{simple_forward.1}
  #allocation0 [shape = 'u32[]', space=smem, size = 0x4, offset = 0x4, fixed_abs, tag = 'smem constant byte address 0x4 - core index']
  #allocation1 [shape = 'u32[72,128]{1,0:T(1,128)}', space=vmem, size = 0x9000, scoped, tag = 'internal scratch']
  %s0 = inlined_call_operand.vmem [shape: f32[8,32], index: 0, kind: input, shape index: {}]
  %s1 = inlined_call_operand.vmem [shape: f32[32,128], index: 1, kind: input, shape index: {}]
  %s2 = inlined_call_operand.vmem [shape: f32[1,128], index: 2, kind: input, shape index: {}]
  %s3 = inlined_call_operand.vmem [shape: f32[8,3], index: 3, kind: output, shape index: {}]
  %s4 = sld [smem:[#allocation0]]
  $region22: #{simple_forward.1} parent=0
    _
  %s6 = ssub.s32 1, %s4
  %s7 = scalar_select 0, %s6, %s4
  // Predicated region
  $region2: #{simple_forward.1} parent=0 // pred_check
    _
  $region3: #{simple_forward.1} parent=0 // pred_check_branch
    %9 = sbr.rel (0) target = $region5
  $region4: #{simple_forward.1} parent=0 // pred_region
    _
  $region5: #{simple_forward.1} parent=0 // pred_fallthru
    _
  // Predicated region
  $region6: #{simple_forward.1} parent=0 // pred_check
    _
  $region7: #{simple_forward.1} parent=0 // pred_check_branch
    %11 = sbr.rel (0) target = $region9
  $region8: #{simple_forward.1} parent=0 // pred_region
    _
  $region9: #{simple_forward.1} parent=0 // pred_fallthru
    _
  // Predicated region
  $region10: #{simple_forward.1} parent=0 // pred_check
    _
  $region11: #{simple_forward.1} parent=0 // pred_check_branch
    %13 = sbr.rel (0) target = $region13
  $region12: #{simple_forward.1} parent=0 // pred_region
    _
  $region13: #{simple_forward.1} parent=0 // pred_fallthru
    _
  %v14 = vld [vmem:[%s0] sm:$0xff]
  %v15 = vld [vmem:[%s1] sm:$0xff]
  %v16 = vld [vmem:[%s1 + $0x8] sm:$0xff]
  %v17 = vld [vmem:[%s1 + $0x10] sm:$0xff]
  %v18 = vld [vmem:[%s1 + $0x18] sm:$0xff]
  %v19 = vld [vmem:[%s2] sm:$0x1]
  %v21 = vperm.slane %v19, 0
  %vm23 = vcmask 261120
  %v25 = vsel %vm23, %v14, 0
  %27 = vmatpush.msra.mxu0 0.0
  %28 = vmatpush.msra.mxu0 0.0
  %29 = vmatpush.msra.mxu0 0.0
  %30 = vmatpush.msra.mxu0 0.0
  %31 = vmatpush.msra.mxu0 0.0
  %32 = vmatpush.msra.mxu0 0.0
  %33 = vmatpush.msra.mxu0 0.0
  %34 = vmatpush.msra.mxu0 0.0
  %35 = vmatpush.msra.mxu0 0.0
  %36 = vmatpush.msra.mxu0 0.0
  %37 = vmatpush.msra.mxu0 0.0
  %38 = vmatpush.msra.mxu0 0.0
  %39 = vmatpush.msra.mxu0 %v18
  %40 = vmatpush.msra.mxu0 %v17
  %41 = vmatpush.msra.mxu0 %v16
  %42 = vmatpush.msra.mxu0 %v15
  %43 = vmatmul.f32.gmra.mxu0 %v25
  %v44 = vpop.f32.mrf.mxu0
  %v45 = vadd.f32 %v21, %v44
  %46 = vdwg.mxu0
  %vm47 = vcmask 23552
  %48 = vst.msk [vmem:[%s3] sm:$0xff] %vm47, %v45
  // Predicated region
  $region14: #{simple_forward.1} parent=0 // pred_check
    _
  $region15: #{simple_forward.1} parent=0 // pred_check_branch
    %50 = sbr.rel (0) target = $region17
  $region16: #{simple_forward.1} parent=0 // pred_region
    _
  $region17: #{simple_forward.1} parent=0 // pred_fallthru
    _
  // Predicated region
  $region18: #{simple_forward.1} parent=0 // pred_check
    _
  $region19: #{simple_forward.1} parent=0 // pred_check_branch
    %52 = sbr.rel (0) target = $region21
  $region20: #{simple_forward.1} parent=0 // pred_region
    _
  $region21: #{simple_forward.1} parent=0 // pred_fallthru
    _

</llo_original>
